<compile_context>
chip_gen: v7x
topology: tpu7x:2x2x1
jax: 0.10.0
libtpu: 0.0.40
codegen_flags: <defaults>
</compile_context>

<pallas_src>
import functools

import jax
import jax.numpy as jnp
from jax.experimental import pallas as pl
from jax.experimental.pallas import tpu as pltpu


NEG_SLOPE = 0.01   # nn.LeakyReLU() default
IN_DIM = 225       # kcs_layer_1 input features (fixed by the module)


def _leaky_relu(v):
    # max(v, slope*v) == leaky_relu(v) for 0 < slope < 1; single VPU op.
    return jnp.maximum(v, NEG_SLOPE * v)


# --- index maps (top-level functions, no late-binding closures) -------------
def _x_map(i):
    return (i, 0)


def _resident_map(i):
    return (0, 0)


# --- kernel ------------------------------------------------------------------
def _kcs_kernel(x_ref,
                w1_ref, w2_ref, w3_ref, w4_ref,
                b123_ref, b4_ref,
                y_ref):
    """One batch tile through the whole 4-layer MLP.

    x is f32 in HBM/VMEM and cast to bf16 here; weights are bf16 (prepared
    once); matmuls accumulate in f32 (preferred_element_type); bias adds and
    LeakyReLU stay in f32.
    """
    x = x_ref[...].astype(jnp.bfloat16)                   # (TM, 225) bf16

    b123 = b123_ref[...]                                  # (3, C) f32
    b1 = b123[0:1, :]
    b2 = b123[1:2, :]
    b3 = b123[2:3, :]

    # kcs_layer_1 + LeakyReLU
    psi = jnp.dot(x, w1_ref[...], preferred_element_type=jnp.float32)
    psi = _leaky_relu(psi + b1)                           # (TM, C) f32
    psi_bf = psi.astype(jnp.bfloat16)                     # reused for matmul + residual
    del psi                                               # shorten f32 live range

    # kcs_layer_2 + LeakyReLU
    d1 = jnp.dot(psi_bf, w2_ref[...], preferred_element_type=jnp.float32)
    d1 = _leaky_relu(d1 + b2).astype(jnp.bfloat16)

    # kcs_layer_3 + residual (no activation); residual uses the bf16 psi copy
    d2 = jnp.dot(d1, w3_ref[...], preferred_element_type=jnp.float32)
    d2 = d2 + b3 + psi_bf.astype(jnp.float32)

    # layer_last + LeakyReLU
    y = jnp.dot(d2.astype(jnp.bfloat16), w4_ref[...],
                preferred_element_type=jnp.float32)
    y = _leaky_relu(y + b4_ref[...])

    y_ref[...] = y.astype(y_ref.dtype)


# --- wrapper -----------------------------------------------------------------
def _select_tm(batch):
    """Batch-tile rows per grid step.

    Prefer large tiles (up to 512) for MXU occupancy on the 256-wide v6e/v7x
    MXU, but keep at least 2 grid steps when the batch allows it so the
    software pipeline has something to overlap and both v7x TCs get work.
    Small batches get a single 8-aligned tile.
    """
    for tm in (512, 256, 128):
        if batch >= 2 * tm:
            return tm
    return min(512, max(8, pl.cdiv(batch, 8) * 8))


def prepare_params(params):
    """One-time preparation (call outside the per-step forward):
    weights -> bf16, biases b1..b3 packed into a single (3, C) f32 array."""
    return dict(
        w1=params["w1"].astype(jnp.bfloat16),
        w2=params["w2"].astype(jnp.bfloat16),
        w3=params["w3"].astype(jnp.bfloat16),
        w4=params["w4"].astype(jnp.bfloat16),
        b123=jnp.concatenate(
            [params["b1"], params["b2"], params["b3"]], axis=0),   # (3, C) f32
        b4=params["b4"],                                           # (1, Cm) f32
    )


@jax.jit
def kcs_path2d_forward(x, prepped):
    """x: (B, 225) float32. prepped: output of prepare_params (bf16 weights)."""
    B, K = x.shape
    C = prepped["w1"].shape[1]
    Cm = prepped["w4"].shape[1]

    tm = _select_tm(B)
    grid = (pl.cdiv(B, tm),)   # ragged last tile handled by Pallas (writes masked)

    # x / y tiled on the batch axis; weights & biases VMEM-resident (constant
    # (0,0) block index every step -> fetched once and reused).
    in_specs = [
        pl.BlockSpec((tm, K), _x_map),            # x tile (K == full dim)
        pl.BlockSpec((K, C), _resident_map),      # w1 (bf16)
        pl.BlockSpec((C, C), _resident_map),      # w2 (bf16)
        pl.BlockSpec((C, C), _resident_map),      # w3 (bf16)
        pl.BlockSpec((C, Cm), _resident_map),     # w4 (bf16)
        pl.BlockSpec((3, C), _resident_map),      # b1..b3 packed (f32)
        pl.BlockSpec((1, Cm), _resident_map),     # b4 (f32)
    ]
    out_spec = pl.BlockSpec((tm, Cm), _x_map)

    flops = 2 * B * (K * C + C * C + C * C + C * Cm)
    bytes_accessed = (
        B * K * 4                                          # x (f32)
        + (K * C + C * C + C * C + C * Cm) * 2             # weights (bf16)
        + (3 * C + Cm) * 4                                 # biases (f32)
        + B * Cm * 4                                       # y (f32)
    )

    return pl.pallas_call(
        _kcs_kernel,
        out_shape=jax.ShapeDtypeStruct((B, Cm), jnp.float32),
        grid=grid,
        in_specs=in_specs,
        out_specs=out_spec,
        compiler_params=pltpu.CompilerParams(
            dimension_semantics=("parallel",),   # megacore-shard batch on v7x
            vmem_limit_bytes=32 << 20,           # headroom for TM up to 512
        ),
        cost_estimate=pl.CostEstimate(
            flops=flops, transcendentals=0, bytes_accessed=bytes_accessed),
    )(x, prepped["w1"], prepped["w2"], prepped["w3"], prepped["w4"],
      prepped["b123"], prepped["b4"])


# --- init & references --------------------------------------------------------
def init_params(key, in_dim=IN_DIM, channel=256, channel_mid=128):
    """Deterministic synthetic init (PyTorch-style uniform(-1/sqrt(fan_in), +))."""
    ks = jax.random.split(key, 8)

    def lin(kw, kb, fan_in, fan_out):
        bound = 1.0 / jnp.sqrt(jnp.float32(fan_in))
        w = jax.random.uniform(kw, (fan_in, fan_out), jnp.float32, -bound, bound)
        b = jax.random.uniform(kb, (1, fan_out), jnp.float32, -bound, bound)
        return w, b

    w1, b1 = lin(ks[0], ks[1], in_dim, channel)
    w2, b2 = lin(ks[2], ks[3], channel, channel)
    w3, b3 = lin(ks[4], ks[5], channel, channel)
    w4, b4 = lin(ks[6], ks[7], channel, channel_mid)
    return dict(w1=w1, b1=b1, w2=w2, b2=b2, w3=w3, b3=b3, w4=w4, b4=b4)


def reference_forward_f32(x, p):
    """Pure-f32 reference (true PyTorch-module semantics)."""
    psi = _leaky_relu(x @ p["w1"] + p["b1"])
    d1 = _leaky_relu(psi @ p["w2"] + p["b2"])
    d2 = d1 @ p["w3"] + p["b3"] + psi
    return _leaky_relu(d2 @ p["w4"] + p["b4"])


def reference_forward_mixed(x, p):
    """Mirrors the kernel's bf16-matmul / f32-epilogue precision exactly."""
    bf = jnp.bfloat16
    psi = _leaky_relu(
        jnp.dot(x.astype(bf), p["w1"].astype(bf),
                preferred_element_type=jnp.float32) + p["b1"])
    psi_bf = psi.astype(bf)
    d1 = _leaky_relu(
        jnp.dot(psi_bf, p["w2"].astype(bf),
                preferred_element_type=jnp.float32) + p["b2"])
    d2 = (jnp.dot(d1.astype(bf), p["w3"].astype(bf),
                  preferred_element_type=jnp.float32)
          + p["b3"] + psi_bf.astype(jnp.float32))
    y = _leaky_relu(
        jnp.dot(d2.astype(bf), p["w4"].astype(bf),
                preferred_element_type=jnp.float32) + p["b4"])
    return y


if __name__ == "__main__":
    key = jax.random.PRNGKey(0)
    k_x, k_p = jax.random.split(key)

    B, CHANNEL, CHANNEL_MID = 64, 256, 128
    x = jax.random.normal(k_x, (B, IN_DIM), jnp.float32)
    params = init_params(k_p, IN_DIM, CHANNEL, CHANNEL_MID)
    prepped = prepare_params(params)   # one-time bf16 cast / bias packing

    y = kcs_path2d_forward(x, prepped)
    y = jax.block_until_ready(y)
    assert y.shape == (B, CHANNEL_MID)

    # Tight check vs a reference with identical (bf16-matmul) precision.
    y_mixed = reference_forward_mixed(x, params)
    assert jnp.allclose(y, y_mixed, atol=2e-2, rtol=2e-2), "mismatch vs mixed-precision reference"

    # Loose check vs the true f32 module semantics (documents the bf16 precision contract).
    y_f32 = reference_forward_f32(x, params)
    assert jnp.allclose(y, y_f32, atol=1e-1, rtol=1e-1), "mismatch vs f32 reference"

    print("KERNEL_OK")
</pallas_src>

<mosaic_0001>
module attributes {stable_mosaic.version = 11 : i64} {
  func.func @_kcs_kernel(%arg0: i32, %arg1: memref<64x225xf32, #tpu.memory_space<vmem>>, %arg2: memref<225x256xbf16, #tpu.memory_space<vmem>>, %arg3: memref<256x256xbf16, #tpu.memory_space<vmem>>, %arg4: memref<256x256xbf16, #tpu.memory_space<vmem>>, %arg5: memref<256x128xbf16, #tpu.memory_space<vmem>>, %arg6: memref<3x256xf32, #tpu.memory_space<vmem>>, %arg7: memref<1x128xf32, #tpu.memory_space<vmem>>, %arg8: memref<64x128xf32, #tpu.memory_space<vmem>>) attributes {dimension_semantics = [#tpu.dimension_semantics<parallel>], iteration_bounds = array<i64: 1>, scalar_prefetch = 0 : i64, scratch_operands = 0 : i64, tpu.core_type = #tpu.core_type<tc>, window_params = [{transform_indices = @transform_0, window_bounds = array<i64: 64, 225>}, {pipeline_mode = #tpu.pipeline_mode<synchronous>, transform_indices = @transform_1, window_bounds = array<i64: 225, 256>}, {pipeline_mode = #tpu.pipeline_mode<synchronous>, transform_indices = @transform_2, window_bounds = array<i64: 256, 256>}, {pipeline_mode = #tpu.pipeline_mode<synchronous>, transform_indices = @transform_3, window_bounds = array<i64: 256, 256>}, {pipeline_mode = #tpu.pipeline_mode<synchronous>, transform_indices = @transform_4, window_bounds = array<i64: 256, 128>}, {pipeline_mode = #tpu.pipeline_mode<synchronous>, transform_indices = @transform_5, window_bounds = array<i64: 3, 256>}, {pipeline_mode = #tpu.pipeline_mode<synchronous>, transform_indices = @transform_6, window_bounds = array<i64: 1, 128>}, {transform_indices = @transform_7, window_bounds = array<i64: 64, 128>}]} {
    %c0 = arith.constant 0 : index
    %c0_0 = arith.constant 0 : index
    %0 = vector.load %arg1[%c0, %c0_0] : memref<64x225xf32, #tpu.memory_space<vmem>>, vector<64x225xf32>
    %1 = arith.truncf %0 : vector<64x225xf32> to vector<64x225xbf16>
    %c0_1 = arith.constant 0 : index
    %c0_2 = arith.constant 0 : index
    %2 = vector.load %arg6[%c0_1, %c0_2] : memref<3x256xf32, #tpu.memory_space<vmem>>, vector<3x256xf32>
    %3 = vector.extract_strided_slice %2 {offsets = [0, 0], sizes = [1, 256], strides = [1, 1]} : vector<3x256xf32> to vector<1x256xf32>
    %4 = vector.extract_strided_slice %2 {offsets = [1, 0], sizes = [1, 256], strides = [1, 1]} : vector<3x256xf32> to vector<1x256xf32>
    %5 = vector.extract_strided_slice %2 {offsets = [2, 0], sizes = [1, 256], strides = [1, 1]} : vector<3x256xf32> to vector<1x256xf32>
    %c0_3 = arith.constant 0 : index
    %c0_4 = arith.constant 0 : index
    %6 = vector.load %arg2[%c0_3, %c0_4] : memref<225x256xbf16, #tpu.memory_space<vmem>>, vector<225x256xbf16>
    %cst = arith.constant dense<0.000000e+00> : vector<64x256xf32>
    %7 = tpu.matmul %1, %6, %cst {dimension_numbers = #tpu.dot_dimension_numbers<[1], [0], [0], [1], [0, 0, 1, 1], [], []>} : vector<64x225xbf16>, vector<225x256xbf16>, vector<64x256xf32> -> vector<64x256xf32>
    %8 = vector.broadcast %3 : vector<1x256xf32> to vector<64x256xf32>
    %9 = arith.addf %7, %8 : vector<64x256xf32>
    %cst_5 = arith.constant 0.00999999977 : f32
    %10 = vector.broadcast %cst_5 : f32 to vector<64x256xf32>
    %11 = arith.mulf %10, %9 : vector<64x256xf32>
    %12 = arith.maximumf %9, %11 : vector<64x256xf32>
    %13 = arith.truncf %12 : vector<64x256xf32> to vector<64x256xbf16>
    %c0_6 = arith.constant 0 : index
    %c0_7 = arith.constant 0 : index
    %14 = vector.load %arg3[%c0_6, %c0_7] : memref<256x256xbf16, #tpu.memory_space<vmem>>, vector<256x256xbf16>
    %cst_8 = arith.constant dense<0.000000e+00> : vector<64x256xf32>
    %15 = tpu.matmul %13, %14, %cst_8 {dimension_numbers = #tpu.dot_dimension_numbers<[1], [0], [0], [1], [0, 0, 1, 1], [], []>} : vector<64x256xbf16>, vector<256x256xbf16>, vector<64x256xf32> -> vector<64x256xf32>
    %16 = vector.broadcast %4 : vector<1x256xf32> to vector<64x256xf32>
    %17 = arith.addf %15, %16 : vector<64x256xf32>
    %cst_9 = arith.constant 0.00999999977 : f32
    %18 = vector.broadcast %cst_9 : f32 to vector<64x256xf32>
    %19 = arith.mulf %18, %17 : vector<64x256xf32>
    %20 = arith.maximumf %17, %19 : vector<64x256xf32>
    %21 = arith.truncf %20 : vector<64x256xf32> to vector<64x256xbf16>
    %c0_10 = arith.constant 0 : index
    %c0_11 = arith.constant 0 : index
    %22 = vector.load %arg4[%c0_10, %c0_11] : memref<256x256xbf16, #tpu.memory_space<vmem>>, vector<256x256xbf16>
    %cst_12 = arith.constant dense<0.000000e+00> : vector<64x256xf32>
    %23 = tpu.matmul %21, %22, %cst_12 {dimension_numbers = #tpu.dot_dimension_numbers<[1], [0], [0], [1], [0, 0, 1, 1], [], []>} : vector<64x256xbf16>, vector<256x256xbf16>, vector<64x256xf32> -> vector<64x256xf32>
    %24 = vector.broadcast %5 : vector<1x256xf32> to vector<64x256xf32>
    %25 = arith.addf %23, %24 : vector<64x256xf32>
    %26 = arith.extf %13 : vector<64x256xbf16> to vector<64x256xf32>
    %27 = arith.addf %25, %26 : vector<64x256xf32>
    %28 = arith.truncf %27 : vector<64x256xf32> to vector<64x256xbf16>
    %c0_13 = arith.constant 0 : index
    %c0_14 = arith.constant 0 : index
    %29 = vector.load %arg5[%c0_13, %c0_14] : memref<256x128xbf16, #tpu.memory_space<vmem>>, vector<256x128xbf16>
    %cst_15 = arith.constant dense<0.000000e+00> : vector<64x128xf32>
    %30 = tpu.matmul %28, %29, %cst_15 {dimension_numbers = #tpu.dot_dimension_numbers<[1], [0], [0], [1], [0, 0, 1, 1], [], []>} : vector<64x256xbf16>, vector<256x128xbf16>, vector<64x128xf32> -> vector<64x128xf32>
    %c0_16 = arith.constant 0 : index
    %c0_17 = arith.constant 0 : index
    %31 = vector.load %arg7[%c0_16, %c0_17] : memref<1x128xf32, #tpu.memory_space<vmem>>, vector<1x128xf32>
    %32 = vector.broadcast %31 : vector<1x128xf32> to vector<64x128xf32>
    %33 = arith.addf %30, %32 : vector<64x128xf32>
    %cst_18 = arith.constant 0.00999999977 : f32
    %34 = vector.broadcast %cst_18 : f32 to vector<64x128xf32>
    %35 = arith.mulf %34, %33 : vector<64x128xf32>
    %36 = arith.maximumf %33, %35 : vector<64x128xf32>
    %c0_19 = arith.constant 0 : index
    %c0_20 = arith.constant 0 : index
    %37 = vector.load %arg8[%c0_19, %c0_20] : memref<64x128xf32, #tpu.memory_space<vmem>>, vector<64x128xf32>
    tpu.vector_store %arg8[%c0_19, %c0_20], %36 {strides = array<i32>} : memref<64x128xf32, #tpu.memory_space<vmem>>, vector<64x128xf32>,
    return
  }
  func.func @transform_0(%arg0: i32) -> (i32, i32) {
    %c0_i32 = arith.constant 0 : i32
    %c0_i32_0 = arith.constant 0 : i32
    return %arg0, %c0_i32 : i32, i32
  }
  func.func @transform_1(%arg0: i32) -> (i32, i32) {
    %c0_i32 = arith.constant 0 : i32
    %c0_i32_0 = arith.constant 0 : i32
    %c0_i32_1 = arith.constant 0 : i32
    return %c0_i32, %c0_i32_0 : i32, i32
  }
  func.func @transform_2(%arg0: i32) -> (i32, i32) {
    %c0_i32 = arith.constant 0 : i32
    %c0_i32_0 = arith.constant 0 : i32
    %c0_i32_1 = arith.constant 0 : i32
    return %c0_i32, %c0_i32_0 : i32, i32
  }
  func.func @transform_3(%arg0: i32) -> (i32, i32) {
    %c0_i32 = arith.constant 0 : i32
    %c0_i32_0 = arith.constant 0 : i32
    %c0_i32_1 = arith.constant 0 : i32
    return %c0_i32, %c0_i32_0 : i32, i32
  }
  func.func @transform_4(%arg0: i32) -> (i32, i32) {
    %c0_i32 = arith.constant 0 : i32
    %c0_i32_0 = arith.constant 0 : i32
    %c0_i32_1 = arith.constant 0 : i32
    return %c0_i32, %c0_i32_0 : i32, i32
  }
  func.func @transform_5(%arg0: i32) -> (i32, i32) {
    %c0_i32 = arith.constant 0 : i32
    %c0_i32_0 = arith.constant 0 : i32
    %c0_i32_1 = arith.constant 0 : i32
    return %c0_i32, %c0_i32_0 : i32, i32
  }
  func.func @transform_6(%arg0: i32) -> (i32, i32) {
    %c0_i32 = arith.constant 0 : i32
    %c0_i32_0 = arith.constant 0 : i32
    %c0_i32_1 = arith.constant 0 : i32
    return %c0_i32, %c0_i32_0 : i32, i32
  }
  func.func @transform_7(%arg0: i32) -> (i32, i32) {
    %c0_i32 = arith.constant 0 : i32
    %c0_i32_0 = arith.constant 0 : i32
    return %arg0, %c0_i32 : i32, i32
  }
}

</mosaic_0001>

<llo_original>
// kernel: kcs_path2d_forward.1
$region0: #{kcs_path2d_forward.1}
  #allocation0 [shape = 'u32[]', space=smem, size = 0x4, offset = 0x4, fixed_abs, tag = 'smem constant byte address 0x4 - core index']
  #allocation1 [shape = 'u32[144,128]{1,0:T(1,128)}', space=vmem, size = 0x12000, scoped, tag = 'internal scratch']
  %s0 = inlined_call_operand.hbm [shape: f32[64,225], index: 0, kind: input, shape index: {}]
  %s1 = inlined_call_operand.hbm [shape: bf16[225,256], index: 1, kind: input, shape index: {}]
  %s2 = inlined_call_operand.hbm [shape: bf16[256,256], index: 2, kind: input, shape index: {}]
  %s3 = inlined_call_operand.hbm [shape: bf16[256,256], index: 3, kind: input, shape index: {}]
  %s4 = inlined_call_operand.hbm [shape: bf16[256,128], index: 4, kind: input, shape index: {}]
  %s5 = inlined_call_operand.hbm [shape: f32[3,256], index: 5, kind: input, shape index: {}]
  %s6 = inlined_call_operand.vmem [shape: f32[1,128], index: 6, kind: input, shape index: {}]
  %s7 = inlined_call_operand.hbm [shape: f32[64,128], index: 7, kind: output, shape index: {}]
  %s8 = sld [smem:[#allocation0]]
  $region62: #{kcs_path2d_forward.1} parent=0
    _
  %s10 = ssub.s32 1, %s8
  %s11 = scalar_select 0, %s10, %s8
  $region1: #{kcs_path2d_forward.1} parent=0
    #allocation2 [shape = 'u8[65536]{0}', space=vmem, size = 0x10000, scoped, tag = 'input window, operand 0, single buffered']
    #allocation3 [shape = 's32[1]{0}', space=sflag, size = 0x4, scoped, tag = 'scoped memory for kcs_path2d_forward.1']
    #allocation4 [shape = 's32[1]{0}', space=sflag, size = 0x4, scoped, tag = 'scoped memory for kcs_path2d_forward.1']
    #allocation5 [shape = 'u8[118784]{0}', space=vmem, size = 0x1d000, scoped, tag = 'input window, operand 1, single buffered']
    #allocation6 [shape = 's32[1]{0}', space=sflag, size = 0x4, scoped, tag = 'scoped memory for kcs_path2d_forward.1']
    #allocation7 [shape = 'u8[131072]{0}', space=vmem, size = 0x20000, scoped, tag = 'input window, operand 2, single buffered']
    #allocation8 [shape = 'u8[131072]{0}', space=vmem, size = 0x20000, scoped, tag = 'input window, operand 3, single buffered']
    #allocation9 [shape = 's32[1]{0}', space=sflag, size = 0x4, scoped, tag = 'scoped memory for kcs_path2d_forward.1']
    #allocation10 [shape = 'u8[65536]{0}', space=vmem, size = 0x10000, scoped, tag = 'input window, operand 4, single buffered']
    #allocation11 [shape = 'u8[4096]{0}', space=vmem, size = 0x1000, scoped, tag = 'input window, operand 5, single buffered']
    #allocation12 [shape = 's32[1]{0}', space=sflag, size = 0x4, scoped, tag = 'scoped memory for kcs_path2d_forward.1']
    #allocation13 [shape = 'u8[32768]{0}', space=vmem, size = 0x8000, scoped, tag = 'output window, operand 0, single buffered']
    %12 = vsyncpa [#allocation3], 0
    %13 = vsyncpa [#allocation6], 0
    %14 = vsyncpa [#allocation9], 0
    %15 = vsyncpa [#allocation12], 0
    %16 = vsyncpa [#allocation4], 0
    // Predicated region
    $region2: #{kcs_path2d_forward.1} parent=1 // pred_check
      _
    $region3: #{kcs_path2d_forward.1} parent=1 // pred_check_branch
      %18 = sbr.rel (0) target = $region5
    $region4: #{kcs_path2d_forward.1} parent=1 // pred_region
      %s20 = ssub.s32 2048, 2048
      %21 = vsyncadd [#allocation3], %s20
      %s22 = sshll.u32 [#allocation2], 4
      %s23 = int_to_ptr.vmem [resolvable:$true] %s22
      %28 = dma.hbm_to_vmem [thread:$0]  %s0, 2048, %s23, [#allocation3], 256, 256, 16
    $region5: #{kcs_path2d_forward.1} parent=1 // pred_fallthru
      _
    // Predicated region
    $region6: #{kcs_path2d_forward.1} parent=1 // pred_check
      _
    $region7: #{kcs_path2d_forward.1} parent=1 // pred_check_branch
      %30 = sbr.rel (0) target = $region9
    $region8: #{kcs_path2d_forward.1} parent=1 // pred_region
      %s32 = ssub.s32 3712, 3712
      %33 = vsyncadd [#allocation6], %s32
      %s34 = sshll.u32 [#allocation5], 4
      %s35 = int_to_ptr.vmem [resolvable:$true] %s34
      %40 = dma.hbm_to_vmem [thread:$0]  %s1, 3712, %s35, [#allocation6], 128, 128, 8
    $region9: #{kcs_path2d_forward.1} parent=1 // pred_fallthru
      _
    // Predicated region
    $region10: #{kcs_path2d_forward.1} parent=1 // pred_check
      _
    $region11: #{kcs_path2d_forward.1} parent=1 // pred_check_branch
      %42 = sbr.rel (0) target = $region13
    $region12: #{kcs_path2d_forward.1} parent=1 // pred_region
      %s44 = ssub.s32 4096, 4096
      %45 = vsyncadd [#allocation6], %s44
      %s46 = sshll.u32 [#allocation7], 4
      %s47 = int_to_ptr.vmem [resolvable:$true] %s46
      %52 = dma.hbm_to_vmem [thread:$0]  %s2, 4096, %s47, [#allocation6], 128, 128, 8
    $region13: #{kcs_path2d_forward.1} parent=1 // pred_fallthru
      _
    // Predicated region
    $region14: #{kcs_path2d_forward.1} parent=1 // pred_check
      _
    $region15: #{kcs_path2d_forward.1} parent=1 // pred_check_branch
      %54 = sbr.rel (0) target = $region17
    $region16: #{kcs_path2d_forward.1} parent=1 // pred_region
      %s56 = ssub.s32 4096, 4096
      %57 = vsyncadd [#allocation9], %s56
      %s58 = sshll.u32 [#allocation8], 4
      %s59 = int_to_ptr.vmem [resolvable:$true] %s58
      %64 = dma.hbm_to_vmem [thread:$0]  %s3, 4096, %s59, [#allocation9], 128, 128, 8
    $region17: #{kcs_path2d_forward.1} parent=1 // pred_fallthru
      _
    // Predicated region
    $region18: #{kcs_path2d_forward.1} parent=1 // pred_check
      _
    $region19: #{kcs_path2d_forward.1} parent=1 // pred_check_branch
      %66 = sbr.rel (0) target = $region21
    $region20: #{kcs_path2d_forward.1} parent=1 // pred_region
      %s68 = ssub.s32 2048, 2048
      %69 = vsyncadd [#allocation9], %s68
      %s70 = sshll.u32 [#allocation10], 4
      %s71 = int_to_ptr.vmem [resolvable:$true] %s70
      %76 = dma.hbm_to_vmem [thread:$0]  %s4, 2048, %s71, [#allocation9], 64, 64, 4
    $region21: #{kcs_path2d_forward.1} parent=1 // pred_fallthru
      _
    // Predicated region
    $region22: #{kcs_path2d_forward.1} parent=1 // pred_check
      _
    $region23: #{kcs_path2d_forward.1} parent=1 // pred_check_branch
      %78 = sbr.rel (0) target = $region25
    $region24: #{kcs_path2d_forward.1} parent=1 // pred_region
      %s80 = ssub.s32 128, 128
      %81 = vsyncadd [#allocation12], %s80
      %s83 = sshll.u32 [#allocation11], 4
      %s84 = int_to_ptr.vmem [resolvable:$true] %s83
      %86 = dma.hbm_to_vmem [thread:$0]  %s5, 128, %s84, [#allocation12]
    $region25: #{kcs_path2d_forward.1} parent=1 // pred_fallthru
      _
    // Predicated region
    $region26: #{kcs_path2d_forward.1} parent=1 // pred_check
      _
    $region27: #{kcs_path2d_forward.1} parent=1 // pred_check_branch
      %88 = sbr.rel (0) target = $region29
    $region28: #{kcs_path2d_forward.1} parent=1 // pred_region
      _
    $region29: #{kcs_path2d_forward.1} parent=1 // pred_fallthru
      _
    // Predicated region
    $region30: #{kcs_path2d_forward.1} parent=1 // pred_check
      _
    $region31: #{kcs_path2d_forward.1} parent=1 // pred_check_branch
      %90 = sbr.rel (0) target = $region33
    $region32: #{kcs_path2d_forward.1} parent=1 // pred_region
      %91 = dma.done [#allocation3], 2048
    $region33: #{kcs_path2d_forward.1} parent=1 // pred_fallthru
      _
    // Predicated region
    $region34: #{kcs_path2d_forward.1} parent=1 // pred_check
      _
    $region35: #{kcs_path2d_forward.1} parent=1 // pred_check_branch
      %93 = sbr.rel (0) target = $region37
    $region36: #{kcs_path2d_forward.1} parent=1 // pred_region
      %94 = dma.done [#allocation6], 3712
    $region37: #{kcs_path2d_forward.1} parent=1 // pred_fallthru
      _
    // Predicated region
    $region38: #{kcs_path2d_forward.1} parent=1 // pred_check
      _
    $region39: #{kcs_path2d_forward.1} parent=1 // pred_check_branch
      %96 = sbr.rel (0) target = $region41
    $region40: #{kcs_path2d_forward.1} parent=1 // pred_region
      %97 = dma.done [#allocation6], 4096
    $region41: #{kcs_path2d_forward.1} parent=1 // pred_fallthru
      _
    // Predicated region
    $region42: #{kcs_path2d_forward.1} parent=1 // pred_check
      _
    $region43: #{kcs_path2d_forward.1} parent=1 // pred_check_branch
      %99 = sbr.rel (0) target = $region45
    $region44: #{kcs_path2d_forward.1} parent=1 // pred_region
      %100 = dma.done [#allocation9], 4096
    $region45: #{kcs_path2d_forward.1} parent=1 // pred_fallthru
      _
    // Predicated region
    $region46: #{kcs_path2d_forward.1} parent=1 // pred_check
      _
    $region47: #{kcs_path2d_forward.1} parent=1 // pred_check_branch
      %102 = sbr.rel (0) target = $region49
    $region48: #{kcs_path2d_forward.1} parent=1 // pred_region
      %103 = dma.done [#allocation9], 2048
    $region49: #{kcs_path2d_forward.1} parent=1 // pred_fallthru
      _
    // Predicated region
    $region50: #{kcs_path2d_forward.1} parent=1 // pred_check
      _
    $region51: #{kcs_path2d_forward.1} parent=1 // pred_check_branch
      %105 = sbr.rel (0) target = $region53
    $region52: #{kcs_path2d_forward.1} parent=1 // pred_region
      %106 = dma.done [#allocation12], 128
    $region53: #{kcs_path2d_forward.1} parent=1 // pred_fallthru
      _
    %v108 = vld [vmem:[#allocation2] sm:$0xff]
    %v109 = vld [vmem:[#allocation2 + $0x8] sm:$0xff]
    %v110 = vld [vmem:[#allocation2 + $0x10] sm:$0xff]
    %v111 = vld [vmem:[#allocation2 + $0x18] sm:$0xff]
    %v112 = vld [vmem:[#allocation2 + $0x20] sm:$0xff]
    %v113 = vld [vmem:[#allocation2 + $0x28] sm:$0xff]
    %v114 = vld [vmem:[#allocation2 + $0x30] sm:$0xff]
    %v115 = vld [vmem:[#allocation2 + $0x38] sm:$0xff]
    %v116 = vld [vmem:[#allocation2 + $0x40] sm:$0xff]
    %v117 = vld [vmem:[#allocation2 + $0x48] sm:$0xff]
    %v118 = vld [vmem:[#allocation2 + $0x50] sm:$0xff]
    %v119 = vld [vmem:[#allocation2 + $0x58] sm:$0xff]
    %v120 = vld [vmem:[#allocation2 + $0x60] sm:$0xff]
    %v121 = vld [vmem:[#allocation2 + $0x68] sm:$0xff]
    %v122 = vld [vmem:[#allocation2 + $0x70] sm:$0xff]
    %v123 = vld [vmem:[#allocation2 + $0x78] sm:$0xff]
    %v124 = vpack.c.bf16 %v110, %v108
    %v125 = vpack.c.bf16 %v111, %v109
    %v126 = vpack.c.bf16 %v114, %v112
    %v127 = vpack.c.bf16 %v115, %v113
    %v128 = vpack.c.bf16 %v118, %v116
    %v129 = vpack.c.bf16 %v119, %v117
    %v130 = vpack.c.bf16 %v122, %v120
    %v131 = vpack.c.bf16 %v123, %v121
    %v132 = vld [vmem:[#allocation11] sm:$0x77]
    %v133 = vld [vmem:[#allocation5] sm:$0xff]
    %v134 = vld [vmem:[#allocation5 + $0x8] sm:$0xff]
    %v135 = vld [vmem:[#allocation5 + $0x10] sm:$0xff]
    %v136 = vld [vmem:[#allocation5 + $0x18] sm:$0xff]
    %v137 = vld [vmem:[#allocation5 + $0x20] sm:$0xff]
    %v138 = vld [vmem:[#allocation5 + $0x28] sm:$0xff]
    %v139 = vld [vmem:[#allocation5 + $0x30] sm:$0xff]
    %v140 = vld [vmem:[#allocation5 + $0x38] sm:$0xff]
    %v141 = vld [vmem:[#allocation5 + $0x40] sm:$0xff]
    %v142 = vld [vmem:[#allocation5 + $0x48] sm:$0xff]
    %v143 = vld [vmem:[#allocation5 + $0x50] sm:$0xff]
    %v144 = vld [vmem:[#allocation5 + $0x58] sm:$0xff]
    %v145 = vld [vmem:[#allocation5 + $0x60] sm:$0xff]
    %v146 = vld [vmem:[#allocation5 + $0x68] sm:$0xff]
    %v147 = vld [vmem:[#allocation5 + $0x70] sm:$0xff]
    %v148 = vld [vmem:[#allocation5 + $0x78] sm:$0xff]
    %v149 = vld [vmem:[#allocation5 + $0x80] sm:$0xff]
    %v150 = vld [vmem:[#allocation5 + $0x88] sm:$0xff]
    %v151 = vld [vmem:[#allocation5 + $0x90] sm:$0xff]
    %v152 = vld [vmem:[#allocation5 + $0x98] sm:$0xff]
    %v153 = vld [vmem:[#allocation5 + $0xa0] sm:$0xff]
    %v154 = vld [vmem:[#allocation5 + $0xa8] sm:$0xff]
    %v155 = vld [vmem:[#allocation5 + $0xb0] sm:$0xff]
    %v156 = vld [vmem:[#allocation5 + $0xb8] sm:$0xff]
    %v157 = vld [vmem:[#allocation5 + $0xc0] sm:$0xff]
    %v158 = vld [vmem:[#allocation5 + $0xc8] sm:$0xff]
    %v159 = vld [vmem:[#allocation5 + $0xd0] sm:$0xff]
    %v160 = vld [vmem:[#allocation5 + $0xd8] sm:$0xff]
    %v161 = vld [vmem:[#allocation5 + $0xe0] sm:$0x11]
    %v163 = vlaneseq
    %v164 = vshrl.u32 %v163, 7
    %v165 = vsub.s32 0, %v164
    %v166 = vrot.slane %v132, %v165
    %v167 = vlaneseq
    %v168 = vshrl.u32 %v167, 7
    %v169 = vsub.s32 4, %v168
    %v170 = vrot.slane %v132, %v169
    %v173 = vlaneseq
    %v174 = vshrl.u32 %v173, 7
    %v175 = vsub.s32 0, %v174
    %v176 = vrot.slane %v166, %v175
    %v177 = vlaneseq
    %v178 = vshrl.u32 %v177, 7
    %v179 = vsub.s32 0, %v178
    %v180 = vrot.slane %v170, %v179
    %v210 = vunpack.c.l.b16 %v133
    %v211 = vunpack.c.h.b16 %v133
    %v212 = vunpack.c.l.b16 %v134
    %v213 = vunpack.c.h.b16 %v134
    %v214 = vunpack.c.l.b16 %v135
    %v215 = vunpack.c.h.b16 %v135
    %v216 = vunpack.c.l.b16 %v136
    %v217 = vunpack.c.h.b16 %v136
    %v218 = vunpack.c.l.b16 %v137
    %v219 = vunpack.c.h.b16 %v137
    %v220 = vunpack.c.l.b16 %v138
    %v221 = vunpack.c.h.b16 %v138
    %v222 = vunpack.c.l.b16 %v139
    %v223 = vunpack.c.h.b16 %v139
    %v224 = vunpack.c.l.b16 %v140
    %v225 = vunpack.c.h.b16 %v140
    %v226 = vunpack.c.l.b16 %v141
    %v227 = vunpack.c.h.b16 %v141
    %v228 = vunpack.c.l.b16 %v142
    %v229 = vunpack.c.h.b16 %v142
    %v230 = vunpack.c.l.b16 %v143
    %v231 = vunpack.c.h.b16 %v143
    %v232 = vunpack.c.l.b16 %v144
    %v233 = vunpack.c.h.b16 %v144
    %v234 = vunpack.c.l.b16 %v145
    %v235 = vunpack.c.h.b16 %v145
    %v236 = vunpack.c.l.b16 %v146
    %v237 = vunpack.c.h.b16 %v146
    %v238 = vunpack.c.l.b16 %v147
    %v239 = vunpack.c.h.b16 %v147
    %v240 = vunpack.c.l.b16 %v148
    %v241 = vunpack.c.h.b16 %v148
    %v242 = vunpack.c.l.b16 %v149
    %v243 = vunpack.c.h.b16 %v149
    %v244 = vunpack.c.l.b16 %v150
    %v245 = vunpack.c.h.b16 %v150
    %v246 = vunpack.c.l.b16 %v151
    %v247 = vunpack.c.h.b16 %v151
    %v248 = vunpack.c.l.b16 %v152
    %v249 = vunpack.c.h.b16 %v152
    %v250 = vunpack.c.l.b16 %v153
    %v251 = vunpack.c.h.b16 %v153
    %v252 = vunpack.c.l.b16 %v154
    %v253 = vunpack.c.h.b16 %v154
    %v254 = vunpack.c.l.b16 %v155
    %v255 = vunpack.c.h.b16 %v155
    %v256 = vunpack.c.l.b16 %v156
    %v257 = vunpack.c.h.b16 %v156
    %v258 = vunpack.c.l.b16 %v157
    %v259 = vunpack.c.h.b16 %v157
    %v260 = vunpack.c.l.b16 %v158
    %v261 = vunpack.c.h.b16 %v158
    %v262 = vunpack.c.l.b16 %v159
    %v263 = vunpack.c.h.b16 %v159
    %v264 = vunpack.c.l.b16 %v160
    %v265 = vunpack.c.h.b16 %v160
    %v266 = vunpack.c.l.b16 %v161
    %v267 = vunpack.c.h.b16 %v161
    %v268 = vpack.c.b16 %v212, %v210
    %v269 = vpack.c.b16 %v213, %v211
    %v270 = vpack.c.b16 %v216, %v214
    %v271 = vpack.c.b16 %v217, %v215
    %v272 = vpack.c.b16 %v220, %v218
    %v273 = vpack.c.b16 %v221, %v219
    %v274 = vpack.c.b16 %v224, %v222
    %v275 = vpack.c.b16 %v225, %v223
    %v276 = vpack.c.b16 %v228, %v226
    %v277 = vpack.c.b16 %v229, %v227
    %v278 = vpack.c.b16 %v232, %v230
    %v279 = vpack.c.b16 %v233, %v231
    %v280 = vpack.c.b16 %v236, %v234
    %v281 = vpack.c.b16 %v237, %v235
    %v282 = vpack.c.b16 %v240, %v238
    %v283 = vpack.c.b16 %v241, %v239
    %v284 = vpack.c.b16 %v244, %v242
    %v285 = vpack.c.b16 %v245, %v243
    %v286 = vpack.c.b16 %v248, %v246
    %v287 = vpack.c.b16 %v249, %v247
    %v288 = vpack.c.b16 %v252, %v250
    %v289 = vpack.c.b16 %v253, %v251
    %v290 = vpack.c.b16 %v256, %v254
    %v291 = vpack.c.b16 %v257, %v255
    %v292 = vpack.c.b16 %v260, %v258
    %v293 = vpack.c.b16 %v261, %v259
    %v294 = vpack.c.b16 %v264, %v262
    %v295 = vpack.c.b16 %v265, %v263
    %v296 = vpack.c.b16 %v266, %v266
    %v297 = vpack.c.b16 %v267, %v267
    %vm326 = vcmask 793600
    %v328 = vsel %vm326, %v125, 0
    %v331 = vsel %vm326, %v127, 0
    %v334 = vsel %vm326, %v129, 0
    %v337 = vsel %vm326, %v131, 0
    %vm339 = vcmask 1040384
    %v340 = vsel 0, 4294967295, 65535
    %v341 = vsel %vm339, %v340, 0
    %v343 = vand.u32 %v296, %v341
    %v346 = vand.u32 %v297, %v341
    %348 = vmatprep.subr.bf16.mxu0 %v269
    %349 = vmatpush1.bf16.msra.mxu0 %v268
    %350 = vmatprep.subr.bf16.mxu0 %v271
    %351 = vmatpush1.bf16.msra.mxu0 %v270
    %352 = vmatprep.subr.bf16.mxu0 %v273
    %353 = vmatpush1.bf16.msra.mxu0 %v272
    %354 = vmatprep.subr.bf16.mxu0 %v275
    %355 = vmatpush1.bf16.msra.mxu0 %v274
    %356 = vmatprep.subr.bf16.mxu0 %v277
    %357 = vmatpush1.bf16.msra.mxu0 %v276
    %358 = vmatprep.subr.bf16.mxu0 %v279
    %359 = vmatpush1.bf16.msra.mxu0 %v278
    %360 = vmatprep.subr.bf16.mxu0 %v281
    %361 = vmatpush1.bf16.msra.mxu0 %v280
    %362 = vmatprep.subr.bf16.mxu0 %v283
    %363 = vmatpush1.bf16.msra.mxu0 %v282
    %364 = vmatprep.subr.bf16.mxu0 %v285
    %365 = vmatpush1.bf16.msra.mxu0 %v284
    %366 = vmatprep.subr.bf16.mxu0 %v287
    %367 = vmatpush1.bf16.msra.mxu0 %v286
    %368 = vmatprep.subr.bf16.mxu0 %v289
    %369 = vmatpush1.bf16.msra.mxu0 %v288
    %370 = vmatprep.subr.bf16.mxu0 %v291
    %371 = vmatpush1.bf16.msra.mxu0 %v290
    %372 = vmatprep.subr.bf16.mxu0 %v293
    %373 = vmatpush1.bf16.msra.mxu0 %v292
    %374 = vmatprep.subr.bf16.mxu0 %v295
    %375 = vmatpush1.bf16.msra.mxu0 %v294
    %376 = vmatprep.subr.bf16.mxu0 %v346
    %377 = vmatpush1.bf16.msra.mxu0 %v343
    %378 = vmatprep.subr.bf16.mxu0 0
    %379 = vmatpush1.bf16.msra.mxu0 0
    %380 = vmatprep.mubr.bf16.mxu0 %v328
    %381 = vmatmul.mubr.bf16.gmra.mrb[0].mxu0 %v124
    %v382 = vpop.f32.mrb[0].mxu0
    %v383 = vadd.f32 %v176, %v382
    %v384 = vpop.f32.mrb[0].mxu0
    %v385 = vadd.f32 %v180, %v384
    %v386 = vpop.f32.mrb[0].mxu0
    %v387 = vadd.f32 %v176, %v386
    %v388 = vpop.f32.mrb[0].mxu0
    %v389 = vadd.f32 %v180, %v388
    %390 = vmatprep.mubr.bf16.mxu0 %v331
    %391 = vmatmul.mubr.bf16.gmra.mrb[0].mxu0 %v126
    %v392 = vpop.f32.mrb[0].mxu0
    %v393 = vadd.f32 %v176, %v392
    %v394 = vpop.f32.mrb[0].mxu0
    %v395 = vadd.f32 %v180, %v394
    %v396 = vpop.f32.mrb[0].mxu0
    %v397 = vadd.f32 %v176, %v396
    %v398 = vpop.f32.mrb[0].mxu0
    %v399 = vadd.f32 %v180, %v398
    %400 = vmatprep.mubr.bf16.mxu0 %v334
    %401 = vmatmul.mubr.bf16.gmra.mrb[0].mxu0 %v128
    %v402 = vpop.f32.mrb[0].mxu0
    %v403 = vadd.f32 %v176, %v402
    %v404 = vpop.f32.mrb[0].mxu0
    %v405 = vadd.f32 %v180, %v404
    %v406 = vpop.f32.mrb[0].mxu0
    %v407 = vadd.f32 %v176, %v406
    %v408 = vpop.f32.mrb[0].mxu0
    %v409 = vadd.f32 %v180, %v408
    %410 = vmatprep.mubr.bf16.mxu0 %v337
    %411 = vmatmul.mubr.bf16.gmra.mrb[0].mxu0 %v130
    %v412 = vpop.f32.mrb[0].mxu0
    %v413 = vadd.f32 %v176, %v412
    %v414 = vpop.f32.mrb[0].mxu0
    %v415 = vadd.f32 %v180, %v414
    %v416 = vpop.f32.mrb[0].mxu0
    %v417 = vadd.f32 %v176, %v416
    %v418 = vpop.f32.mrb[0].mxu0
    %v419 = vadd.f32 %v180, %v418
    %420 = vdwg.mxu0
    %v421 = vmul.f32 %v383, 0.01
    %v422 = vmul.f32 %v385, 0.01
    %v423 = vmul.f32 %v387, 0.01
    %v424 = vmul.f32 %v389, 0.01
    %v425 = vmul.f32 %v393, 0.01
    %v426 = vmul.f32 %v395, 0.01
    %v427 = vmul.f32 %v397, 0.01
    %v428 = vmul.f32 %v399, 0.01
    %v429 = vmul.f32 %v403, 0.01
    %v430 = vmul.f32 %v405, 0.01
    %v431 = vmul.f32 %v407, 0.01
    %v432 = vmul.f32 %v409, 0.01
    %v433 = vmul.f32 %v413, 0.01
    %v434 = vmul.f32 %v415, 0.01
    %v435 = vmul.f32 %v417, 0.01
    %v436 = vmul.f32 %v419, 0.01
    %v437 = vmax.f32 %v383, %v421
    %v438 = vmax.f32 %v385, %v422
    %v439 = vmax.f32 %v387, %v423
    %v440 = vmax.f32 %v389, %v424
    %v441 = vmax.f32 %v393, %v425
    %v442 = vmax.f32 %v395, %v426
    %v443 = vmax.f32 %v397, %v427
    %v444 = vmax.f32 %v399, %v428
    %v445 = vmax.f32 %v403, %v429
    %v446 = vmax.f32 %v405, %v430
    %v447 = vmax.f32 %v407, %v431
    %v448 = vmax.f32 %v409, %v432
    %v449 = vmax.f32 %v413, %v433
    %v450 = vmax.f32 %v415, %v434
    %v451 = vmax.f32 %v417, %v435
    %v452 = vmax.f32 %v419, %v436
    %v453 = vpack.c.bf16 %v439, %v437
    %v454 = vpack.c.bf16 %v440, %v438
    %v455 = vpack.c.bf16 %v443, %v441
    %v456 = vpack.c.bf16 %v444, %v442
    %v457 = vpack.c.bf16 %v447, %v445
    %v458 = vpack.c.bf16 %v448, %v446
    %v459 = vpack.c.bf16 %v451, %v449
    %v460 = vpack.c.bf16 %v452, %v450
    %v461 = vld [vmem:[#allocation7] sm:$0xff]
    %v462 = vld [vmem:[#allocation7 + $0x8] sm:$0xff]
    %v463 = vld [vmem:[#allocation7 + $0x10] sm:$0xff]
    %v464 = vld [vmem:[#allocation7 + $0x18] sm:$0xff]
    %v465 = vld [vmem:[#allocation7 + $0x20] sm:$0xff]
    %v466 = vld [vmem:[#allocation7 + $0x28] sm:$0xff]
    %v467 = vld [vmem:[#allocation7 + $0x30] sm:$0xff]
    %v468 = vld [vmem:[#allocation7 + $0x38] sm:$0xff]
    %v469 = vld [vmem:[#allocation7 + $0x40] sm:$0xff]
    %v470 = vld [vmem:[#allocation7 + $0x48] sm:$0xff]
    %v471 = vld [vmem:[#allocation7 + $0x50] sm:$0xff]
    %v472 = vld [vmem:[#allocation7 + $0x58] sm:$0xff]
    %v473 = vld [vmem:[#allocation7 + $0x60] sm:$0xff]
    %v474 = vld [vmem:[#allocation7 + $0x68] sm:$0xff]
    %v475 = vld [vmem:[#allocation7 + $0x70] sm:$0xff]
    %v476 = vld [vmem:[#allocation7 + $0x78] sm:$0xff]
    %v477 = vld [vmem:[#allocation7 + $0x80] sm:$0xff]
    %v478 = vld [vmem:[#allocation7 + $0x88] sm:$0xff]
    %v479 = vld [vmem:[#allocation7 + $0x90] sm:$0xff]
    %v480 = vld [vmem:[#allocation7 + $0x98] sm:$0xff]
    %v481 = vld [vmem:[#allocation7 + $0xa0] sm:$0xff]
    %v482 = vld [vmem:[#allocation7 + $0xa8] sm:$0xff]
    %v483 = vld [vmem:[#allocation7 + $0xb0] sm:$0xff]
    %v484 = vld [vmem:[#allocation7 + $0xb8] sm:$0xff]
    %v485 = vld [vmem:[#allocation7 + $0xc0] sm:$0xff]
    %v486 = vld [vmem:[#allocation7 + $0xc8] sm:$0xff]
    %v487 = vld [vmem:[#allocation7 + $0xd0] sm:$0xff]
    %v488 = vld [vmem:[#allocation7 + $0xd8] sm:$0xff]
    %v489 = vld [vmem:[#allocation7 + $0xe0] sm:$0xff]
    %v490 = vld [vmem:[#allocation7 + $0xe8] sm:$0xff]
    %v491 = vld [vmem:[#allocation7 + $0xf0] sm:$0xff]
    %v492 = vld [vmem:[#allocation7 + $0xf8] sm:$0xff]
    %v493 = vlaneseq
    %v494 = vshrl.u32 %v493, 7
    %v495 = vsub.s32 1, %v494
    %v496 = vrot.slane %v132, %v495
    %v497 = vlaneseq
    %v498 = vshrl.u32 %v497, 7
    %v499 = vsub.s32 5, %v498
    %v500 = vrot.slane %v132, %v499
    %v503 = vlaneseq
    %v504 = vshrl.u32 %v503, 7
    %v505 = vsub.s32 1, %v504
    %v506 = vrot.slane %v496, %v505
    %v507 = vlaneseq
    %v508 = vshrl.u32 %v507, 7
    %v509 = vsub.s32 1, %v508
    %v510 = vrot.slane %v500, %v509
    %v543 = vunpack.c.l.b16 %v461
    %v544 = vunpack.c.h.b16 %v461
    %v545 = vunpack.c.l.b16 %v462
    %v546 = vunpack.c.h.b16 %v462
    %v547 = vunpack.c.l.b16 %v463
    %v548 = vunpack.c.h.b16 %v463
    %v549 = vunpack.c.l.b16 %v464
    %v550 = vunpack.c.h.b16 %v464
    %v551 = vunpack.c.l.b16 %v465
    %v552 = vunpack.c.h.b16 %v465
    %v553 = vunpack.c.l.b16 %v466
    %v554 = vunpack.c.h.b16 %v466
    %v555 = vunpack.c.l.b16 %v467
    %v556 = vunpack.c.h.b16 %v467
    %v557 = vunpack.c.l.b16 %v468
    %v558 = vunpack.c.h.b16 %v468
    %v559 = vunpack.c.l.b16 %v469
    %v560 = vunpack.c.h.b16 %v469
    %v561 = vunpack.c.l.b16 %v470
    %v562 = vunpack.c.h.b16 %v470
    %v563 = vunpack.c.l.b16 %v471
    %v564 = vunpack.c.h.b16 %v471
    %v565 = vunpack.c.l.b16 %v472
    %v566 = vunpack.c.h.b16 %v472
    %v567 = vunpack.c.l.b16 %v473
    %v568 = vunpack.c.h.b16 %v473
    %v569 = vunpack.c.l.b16 %v474
    %v570 = vunpack.c.h.b16 %v474
    %v571 = vunpack.c.l.b16 %v475
    %v572 = vunpack.c.h.b16 %v475
    %v573 = vunpack.c.l.b16 %v476
    %v574 = vunpack.c.h.b16 %v476
    %v575 = vunpack.c.l.b16 %v477
    %v576 = vunpack.c.h.b16 %v477
    %v577 = vunpack.c.l.b16 %v478
    %v578 = vunpack.c.h.b16 %v478
    %v579 = vunpack.c.l.b16 %v479
    %v580 = vunpack.c.h.b16 %v479
    %v581 = vunpack.c.l.b16 %v480
    %v582 = vunpack.c.h.b16 %v480
    %v583 = vunpack.c.l.b16 %v481
    %v584 = vunpack.c.h.b16 %v481
    %v585 = vunpack.c.l.b16 %v482
    %v586 = vunpack.c.h.b16 %v482
    %v587 = vunpack.c.l.b16 %v483
    %v588 = vunpack.c.h.b16 %v483
    %v589 = vunpack.c.l.b16 %v484
    %v590 = vunpack.c.h.b16 %v484
    %v591 = vunpack.c.l.b16 %v485
    %v592 = vunpack.c.h.b16 %v485
    %v593 = vunpack.c.l.b16 %v486
    %v594 = vunpack.c.h.b16 %v486
    %v595 = vunpack.c.l.b16 %v487
    %v596 = vunpack.c.h.b16 %v487
    %v597 = vunpack.c.l.b16 %v488
    %v598 = vunpack.c.h.b16 %v488
    %v599 = vunpack.c.l.b16 %v489
    %v600 = vunpack.c.h.b16 %v489
    %v601 = vunpack.c.l.b16 %v490
    %v602 = vunpack.c.h.b16 %v490
    %v603 = vunpack.c.l.b16 %v491
    %v604 = vunpack.c.h.b16 %v491
    %v605 = vunpack.c.l.b16 %v492
    %v606 = vunpack.c.h.b16 %v492
    %v607 = vpack.c.b16 %v545, %v543
    %v608 = vpack.c.b16 %v546, %v544
    %v609 = vpack.c.b16 %v549, %v547
    %v610 = vpack.c.b16 %v550, %v548
    %v611 = vpack.c.b16 %v553, %v551
    %v612 = vpack.c.b16 %v554, %v552
    %v613 = vpack.c.b16 %v557, %v555
    %v614 = vpack.c.b16 %v558, %v556
    %v615 = vpack.c.b16 %v561, %v559
    %v616 = vpack.c.b16 %v562, %v560
    %v617 = vpack.c.b16 %v565, %v563
    %v618 = vpack.c.b16 %v566, %v564
    %v619 = vpack.c.b16 %v569, %v567
    %v620 = vpack.c.b16 %v570, %v568
    %v621 = vpack.c.b16 %v573, %v571
    %v622 = vpack.c.b16 %v574, %v572
    %v623 = vpack.c.b16 %v577, %v575
    %v624 = vpack.c.b16 %v578, %v576
    %v625 = vpack.c.b16 %v581, %v579
    %v626 = vpack.c.b16 %v582, %v580
    %v627 = vpack.c.b16 %v585, %v583
    %v628 = vpack.c.b16 %v586, %v584
    %v629 = vpack.c.b16 %v589, %v587
    %v630 = vpack.c.b16 %v590, %v588
    %v631 = vpack.c.b16 %v593, %v591
    %v632 = vpack.c.b16 %v594, %v592
    %v633 = vpack.c.b16 %v597, %v595
    %v634 = vpack.c.b16 %v598, %v596
    %v635 = vpack.c.b16 %v601, %v599
    %v636 = vpack.c.b16 %v602, %v600
    %v637 = vpack.c.b16 %v605, %v603
    %v638 = vpack.c.b16 %v606, %v604
    %671 = vmatprep.subr.bf16.mxu0 %v608
    %672 = vmatpush1.bf16.msra.mxu0 %v607
    %673 = vmatprep.subr.bf16.mxu0 %v610
    %674 = vmatpush1.bf16.msra.mxu0 %v609
    %675 = vmatprep.subr.bf16.mxu0 %v612
    %676 = vmatpush1.bf16.msra.mxu0 %v611
    %677 = vmatprep.subr.bf16.mxu0 %v614
    %678 = vmatpush1.bf16.msra.mxu0 %v613
    %679 = vmatprep.subr.bf16.mxu0 %v616
    %680 = vmatpush1.bf16.msra.mxu0 %v615
    %681 = vmatprep.subr.bf16.mxu0 %v618
    %682 = vmatpush1.bf16.msra.mxu0 %v617
    %683 = vmatprep.subr.bf16.mxu0 %v620
    %684 = vmatpush1.bf16.msra.mxu0 %v619
    %685 = vmatprep.subr.bf16.mxu0 %v622
    %686 = vmatpush1.bf16.msra.mxu0 %v621
    %687 = vmatprep.subr.bf16.mxu0 %v624
    %688 = vmatpush1.bf16.msra.mxu0 %v623
    %689 = vmatprep.subr.bf16.mxu0 %v626
    %690 = vmatpush1.bf16.msra.mxu0 %v625
    %691 = vmatprep.subr.bf16.mxu0 %v628
    %692 = vmatpush1.bf16.msra.mxu0 %v627
    %693 = vmatprep.subr.bf16.mxu0 %v630
    %694 = vmatpush1.bf16.msra.mxu0 %v629
    %695 = vmatprep.subr.bf16.mxu0 %v632
    %696 = vmatpush1.bf16.msra.mxu0 %v631
    %697 = vmatprep.subr.bf16.mxu0 %v634
    %698 = vmatpush1.bf16.msra.mxu0 %v633
    %699 = vmatprep.subr.bf16.mxu0 %v636
    %700 = vmatpush1.bf16.msra.mxu0 %v635
    %701 = vmatprep.subr.bf16.mxu0 %v638
    %702 = vmatpush1.bf16.msra.mxu0 %v637
    %703 = vmatprep.mubr.bf16.mxu0 %v454
    %704 = vmatmul.mubr.bf16.gmra.mrb[0].mxu0 %v453
    %v705 = vpop.f32.mrb[0].mxu0
    %v706 = vadd.f32 %v506, %v705
    %v707 = vpop.f32.mrb[0].mxu0
    %v708 = vadd.f32 %v510, %v707
    %v709 = vpop.f32.mrb[0].mxu0
    %v710 = vadd.f32 %v506, %v709
    %v711 = vpop.f32.mrb[0].mxu0
    %v712 = vadd.f32 %v510, %v711
    %713 = vmatprep.mubr.bf16.mxu0 %v456
    %714 = vmatmul.mubr.bf16.gmra.mrb[0].mxu0 %v455
    %v715 = vpop.f32.mrb[0].mxu0
    %v716 = vadd.f32 %v506, %v715
    %v717 = vpop.f32.mrb[0].mxu0
    %v718 = vadd.f32 %v510, %v717
    %v719 = vpop.f32.mrb[0].mxu0
    %v720 = vadd.f32 %v506, %v719
    %v721 = vpop.f32.mrb[0].mxu0
    %v722 = vadd.f32 %v510, %v721
    %723 = vmatprep.mubr.bf16.mxu0 %v458
    %724 = vmatmul.mubr.bf16.gmra.mrb[0].mxu0 %v457
    %v725 = vpop.f32.mrb[0].mxu0
    %v726 = vadd.f32 %v506, %v725
    %v727 = vpop.f32.mrb[0].mxu0
    %v728 = vadd.f32 %v510, %v727
    %v729 = vpop.f32.mrb[0].mxu0
    %v730 = vadd.f32 %v506, %v729
    %v731 = vpop.f32.mrb[0].mxu0
    %v732 = vadd.f32 %v510, %v731
    %733 = vmatprep.mubr.bf16.mxu0 %v460
    %734 = vmatmul.mubr.bf16.gmra.mrb[0].mxu0 %v459
    %v735 = vpop.f32.mrb[0].mxu0
    %v736 = vadd.f32 %v506, %v735
    %v737 = vpop.f32.mrb[0].mxu0
    %v738 = vadd.f32 %v510, %v737
    %v739 = vpop.f32.mrb[0].mxu0
    %v740 = vadd.f32 %v506, %v739
    %v741 = vpop.f32.mrb[0].mxu0
    %v742 = vadd.f32 %v510, %v741
    %743 = vdwg.mxu0
    %v744 = vmul.f32 %v706, 0.01
    %v745 = vmul.f32 %v708, 0.01
    %v746 = vmul.f32 %v710, 0.01
    %v747 = vmul.f32 %v712, 0.01
    %v748 = vmul.f32 %v716, 0.01
    %v749 = vmul.f32 %v718, 0.01
    %v750 = vmul.f32 %v720, 0.01
    %v751 = vmul.f32 %v722, 0.01
    %v752 = vmul.f32 %v726, 0.01
    %v753 = vmul.f32 %v728, 0.01
    %v754 = vmul.f32 %v730, 0.01
    %v755 = vmul.f32 %v732, 0.01
    %v756 = vmul.f32 %v736, 0.01
    %v757 = vmul.f32 %v738, 0.01
    %v758 = vmul.f32 %v740, 0.01
    %v759 = vmul.f32 %v742, 0.01
    %v760 = vmax.f32 %v706, %v744
    %v761 = vmax.f32 %v708, %v745
    %v762 = vmax.f32 %v710, %v746
    %v763 = vmax.f32 %v712, %v747
    %v764 = vmax.f32 %v716, %v748
    %v765 = vmax.f32 %v718, %v749
    %v766 = vmax.f32 %v720, %v750
    %v767 = vmax.f32 %v722, %v751
    %v768 = vmax.f32 %v726, %v752
    %v769 = vmax.f32 %v728, %v753
    %v770 = vmax.f32 %v730, %v754
    %v771 = vmax.f32 %v732, %v755
    %v772 = vmax.f32 %v736, %v756
    %v773 = vmax.f32 %v738, %v757
    %v774 = vmax.f32 %v740, %v758
    %v775 = vmax.f32 %v742, %v759
    %v776 = vpack.c.bf16 %v762, %v760
    %v777 = vpack.c.bf16 %v763, %v761
    %v778 = vpack.c.bf16 %v766, %v764
    %v779 = vpack.c.bf16 %v767, %v765
    %v780 = vpack.c.bf16 %v770, %v768
    %v781 = vpack.c.bf16 %v771, %v769
    %v782 = vpack.c.bf16 %v774, %v772
    %v783 = vpack.c.bf16 %v775, %v773
    %v784 = vld [vmem:[#allocation8] sm:$0xff]
    %v785 = vld [vmem:[#allocation8 + $0x8] sm:$0xff]
    %v786 = vld [vmem:[#allocation8 + $0x10] sm:$0xff]
    %v787 = vld [vmem:[#allocation8 + $0x18] sm:$0xff]
    %v788 = vld [vmem:[#allocation8 + $0x20] sm:$0xff]
    %v789 = vld [vmem:[#allocation8 + $0x28] sm:$0xff]
    %v790 = vld [vmem:[#allocation8 + $0x30] sm:$0xff]
    %v791 = vld [vmem:[#allocation8 + $0x38] sm:$0xff]
    %v792 = vld [vmem:[#allocation8 + $0x40] sm:$0xff]
    %v793 = vld [vmem:[#allocation8 + $0x48] sm:$0xff]
    %v794 = vld [vmem:[#allocation8 + $0x50] sm:$0xff]
    %v795 = vld [vmem:[#allocation8 + $0x58] sm:$0xff]
    %v796 = vld [vmem:[#allocation8 + $0x60] sm:$0xff]
    %v797 = vld [vmem:[#allocation8 + $0x68] sm:$0xff]
    %v798 = vld [vmem:[#allocation8 + $0x70] sm:$0xff]
    %v799 = vld [vmem:[#allocation8 + $0x78] sm:$0xff]
    %v800 = vld [vmem:[#allocation8 + $0x80] sm:$0xff]
    %v801 = vld [vmem:[#allocation8 + $0x88] sm:$0xff]
    %v802 = vld [vmem:[#allocation8 + $0x90] sm:$0xff]
    %v803 = vld [vmem:[#allocation8 + $0x98] sm:$0xff]
    %v804 = vld [vmem:[#allocation8 + $0xa0] sm:$0xff]
    %v805 = vld [vmem:[#allocation8 + $0xa8] sm:$0xff]
    %v806 = vld [vmem:[#allocation8 + $0xb0] sm:$0xff]
    %v807 = vld [vmem:[#allocation8 + $0xb8] sm:$0xff]
    %v808 = vld [vmem:[#allocation8 + $0xc0] sm:$0xff]
    %v809 = vld [vmem:[#allocation8 + $0xc8] sm:$0xff]
    %v810 = vld [vmem:[#allocation8 + $0xd0] sm:$0xff]
    %v811 = vld [vmem:[#allocation8 + $0xd8] sm:$0xff]
    %v812 = vld [vmem:[#allocation8 + $0xe0] sm:$0xff]
    %v813 = vld [vmem:[#allocation8 + $0xe8] sm:$0xff]
    %v814 = vld [vmem:[#allocation8 + $0xf0] sm:$0xff]
    %v815 = vld [vmem:[#allocation8 + $0xf8] sm:$0xff]
    %v816 = vlaneseq
    %v817 = vshrl.u32 %v816, 7
    %v818 = vsub.s32 2, %v817
    %v819 = vrot.slane %v132, %v818
    %v820 = vlaneseq
    %v821 = vshrl.u32 %v820, 7
    %v822 = vsub.s32 6, %v821
    %v823 = vrot.slane %v132, %v822
    %v826 = vlaneseq
    %v827 = vshrl.u32 %v826, 7
    %v828 = vsub.s32 2, %v827
    %v829 = vrot.slane %v819, %v828
    %v830 = vlaneseq
    %v831 = vshrl.u32 %v830, 7
    %v832 = vsub.s32 2, %v831
    %v833 = vrot.slane %v823, %v832
    %v866 = vunpack.c.l.b16 %v784
    %v867 = vunpack.c.h.b16 %v784
    %v868 = vunpack.c.l.b16 %v785
    %v869 = vunpack.c.h.b16 %v785
    %v870 = vunpack.c.l.b16 %v786
    %v871 = vunpack.c.h.b16 %v786
    %v872 = vunpack.c.l.b16 %v787
    %v873 = vunpack.c.h.b16 %v787
    %v874 = vunpack.c.l.b16 %v788
    %v875 = vunpack.c.h.b16 %v788
    %v876 = vunpack.c.l.b16 %v789
    %v877 = vunpack.c.h.b16 %v789
    %v878 = vunpack.c.l.b16 %v790
    %v879 = vunpack.c.h.b16 %v790
    %v880 = vunpack.c.l.b16 %v791
    %v881 = vunpack.c.h.b16 %v791
    %v882 = vunpack.c.l.b16 %v792
    %v883 = vunpack.c.h.b16 %v792
    %v884 = vunpack.c.l.b16 %v793
    %v885 = vunpack.c.h.b16 %v793
    %v886 = vunpack.c.l.b16 %v794
    %v887 = vunpack.c.h.b16 %v794
    %v888 = vunpack.c.l.b16 %v795
    %v889 = vunpack.c.h.b16 %v795
    %v890 = vunpack.c.l.b16 %v796
    %v891 = vunpack.c.h.b16 %v796
    %v892 = vunpack.c.l.b16 %v797
    %v893 = vunpack.c.h.b16 %v797
    %v894 = vunpack.c.l.b16 %v798
    %v895 = vunpack.c.h.b16 %v798
    %v896 = vunpack.c.l.b16 %v799
    %v897 = vunpack.c.h.b16 %v799
    %v898 = vunpack.c.l.b16 %v800
    %v899 = vunpack.c.h.b16 %v800
    %v900 = vunpack.c.l.b16 %v801
    %v901 = vunpack.c.h.b16 %v801
    %v902 = vunpack.c.l.b16 %v802
    %v903 = vunpack.c.h.b16 %v802
    %v904 = vunpack.c.l.b16 %v803
    %v905 = vunpack.c.h.b16 %v803
    %v906 = vunpack.c.l.b16 %v804
    %v907 = vunpack.c.h.b16 %v804
    %v908 = vunpack.c.l.b16 %v805
    %v909 = vunpack.c.h.b16 %v805
    %v910 = vunpack.c.l.b16 %v806
    %v911 = vunpack.c.h.b16 %v806
    %v912 = vunpack.c.l.b16 %v807
    %v913 = vunpack.c.h.b16 %v807
    %v914 = vunpack.c.l.b16 %v808
    %v915 = vunpack.c.h.b16 %v808
    %v916 = vunpack.c.l.b16 %v809
    %v917 = vunpack.c.h.b16 %v809
    %v918 = vunpack.c.l.b16 %v810
    %v919 = vunpack.c.h.b16 %v810
    %v920 = vunpack.c.l.b16 %v811
    %v921 = vunpack.c.h.b16 %v811
    %v922 = vunpack.c.l.b16 %v812
    %v923 = vunpack.c.h.b16 %v812
    %v924 = vunpack.c.l.b16 %v813
    %v925 = vunpack.c.h.b16 %v813
    %v926 = vunpack.c.l.b16 %v814
    %v927 = vunpack.c.h.b16 %v814
    %v928 = vunpack.c.l.b16 %v815
    %v929 = vunpack.c.h.b16 %v815
    %v930 = vpack.c.b16 %v868, %v866
    %v931 = vpack.c.b16 %v869, %v867
    %v932 = vpack.c.b16 %v872, %v870
    %v933 = vpack.c.b16 %v873, %v871
    %v934 = vpack.c.b16 %v876, %v874
    %v935 = vpack.c.b16 %v877, %v875
    %v936 = vpack.c.b16 %v880, %v878
    %v937 = vpack.c.b16 %v881, %v879
    %v938 = vpack.c.b16 %v884, %v882
    %v939 = vpack.c.b16 %v885, %v883
    %v940 = vpack.c.b16 %v888, %v886
    %v941 = vpack.c.b16 %v889, %v887
    %v942 = vpack.c.b16 %v892, %v890
    %v943 = vpack.c.b16 %v893, %v891
    %v944 = vpack.c.b16 %v896, %v894
    %v945 = vpack.c.b16 %v897, %v895
    %v946 = vpack.c.b16 %v900, %v898
    %v947 = vpack.c.b16 %v901, %v899
    %v948 = vpack.c.b16 %v904, %v902
    %v949 = vpack.c.b16 %v905, %v903
    %v950 = vpack.c.b16 %v908, %v906
    %v951 = vpack.c.b16 %v909, %v907
    %v952 = vpack.c.b16 %v912, %v910
    %v953 = vpack.c.b16 %v913, %v911
    %v954 = vpack.c.b16 %v916, %v914
    %v955 = vpack.c.b16 %v917, %v915
    %v956 = vpack.c.b16 %v920, %v918
    %v957 = vpack.c.b16 %v921, %v919
    %v958 = vpack.c.b16 %v924, %v922
    %v959 = vpack.c.b16 %v925, %v923
    %v960 = vpack.c.b16 %v928, %v926
    %v961 = vpack.c.b16 %v929, %v927
    %994 = vmatprep.subr.bf16.mxu0 %v931
    %995 = vmatpush1.bf16.msra.mxu0 %v930
    %996 = vmatprep.subr.bf16.mxu0 %v933
    %997 = vmatpush1.bf16.msra.mxu0 %v932
    %998 = vmatprep.subr.bf16.mxu0 %v935
    %999 = vmatpush1.bf16.msra.mxu0 %v934
    %1000 = vmatprep.subr.bf16.mxu0 %v937
    %1001 = vmatpush1.bf16.msra.mxu0 %v936
    %1002 = vmatprep.subr.bf16.mxu0 %v939
    %1003 = vmatpush1.bf16.msra.mxu0 %v938
    %1004 = vmatprep.subr.bf16.mxu0 %v941
    %1005 = vmatpush1.bf16.msra.mxu0 %v940
    %1006 = vmatprep.subr.bf16.mxu0 %v943
    %1007 = vmatpush1.bf16.msra.mxu0 %v942
    %1008 = vmatprep.subr.bf16.mxu0 %v945
    %1009 = vmatpush1.bf16.msra.mxu0 %v944
    %1010 = vmatprep.subr.bf16.mxu0 %v947
    %1011 = vmatpush1.bf16.msra.mxu0 %v946
    %1012 = vmatprep.subr.bf16.mxu0 %v949
    %1013 = vmatpush1.bf16.msra.mxu0 %v948
    %1014 = vmatprep.subr.bf16.mxu0 %v951
    %1015 = vmatpush1.bf16.msra.mxu0 %v950
    %1016 = vmatprep.subr.bf16.mxu0 %v953
    %1017 = vmatpush1.bf16.msra.mxu0 %v952
    %1018 = vmatprep.subr.bf16.mxu0 %v955
    %1019 = vmatpush1.bf16.msra.mxu0 %v954
    %1020 = vmatprep.subr.bf16.mxu0 %v957
    %1021 = vmatpush1.bf16.msra.mxu0 %v956
    %1022 = vmatprep.subr.bf16.mxu0 %v959
    %1023 = vmatpush1.bf16.msra.mxu0 %v958
    %1024 = vmatprep.subr.bf16.mxu0 %v961
    %1025 = vmatpush1.bf16.msra.mxu0 %v960
    %1026 = vmatprep.mubr.bf16.mxu0 %v777
    %1027 = vmatmul.mubr.bf16.gmra.mrb[0].mxu0 %v776
    %v1028 = vpop.f32.mrb[0].mxu0
    %v1029 = vadd.f32 %v829, %v1028
    %v1030 = vpop.f32.mrb[0].mxu0
    %v1031 = vadd.f32 %v833, %v1030
    %v1032 = vpop.f32.mrb[0].mxu0
    %v1033 = vadd.f32 %v829, %v1032
    %v1034 = vpop.f32.mrb[0].mxu0
    %v1035 = vadd.f32 %v833, %v1034
    %1036 = vmatprep.mubr.bf16.mxu0 %v779
    %1037 = vmatmul.mubr.bf16.gmra.mrb[0].mxu0 %v778
    %v1038 = vpop.f32.mrb[0].mxu0
    %v1039 = vadd.f32 %v829, %v1038
    %v1040 = vpop.f32.mrb[0].mxu0
    %v1041 = vadd.f32 %v833, %v1040
    %v1042 = vpop.f32.mrb[0].mxu0
    %v1043 = vadd.f32 %v829, %v1042
    %v1044 = vpop.f32.mrb[0].mxu0
    %v1045 = vadd.f32 %v833, %v1044
    %1046 = vmatprep.mubr.bf16.mxu0 %v781
    %1047 = vmatmul.mubr.bf16.gmra.mrb[0].mxu0 %v780
    %v1048 = vpop.f32.mrb[0].mxu0
    %v1049 = vadd.f32 %v829, %v1048
    %v1050 = vpop.f32.mrb[0].mxu0
    %v1051 = vadd.f32 %v833, %v1050
    %v1052 = vpop.f32.mrb[0].mxu0
    %v1053 = vadd.f32 %v829, %v1052
    %v1054 = vpop.f32.mrb[0].mxu0
    %v1055 = vadd.f32 %v833, %v1054
    %1056 = vmatprep.mubr.bf16.mxu0 %v783
    %1057 = vmatmul.mubr.bf16.gmra.mrb[0].mxu0 %v782
    %v1058 = vpop.f32.mrb[0].mxu0
    %v1059 = vadd.f32 %v829, %v1058
    %v1060 = vpop.f32.mrb[0].mxu0
    %v1061 = vadd.f32 %v833, %v1060
    %v1062 = vpop.f32.mrb[0].mxu0
    %v1063 = vadd.f32 %v829, %v1062
    %v1064 = vpop.f32.mrb[0].mxu0
    %v1065 = vadd.f32 %v833, %v1064
    %1066 = vdwg.mxu0
    %v1067 = vunpack.c.l.bf16 %v453
    %v1068 = vunpack.c.l.bf16 %v454
    %v1069 = vunpack.c.h.bf16 %v453
    %v1070 = vunpack.c.h.bf16 %v454
    %v1071 = vunpack.c.l.bf16 %v455
    %v1072 = vunpack.c.l.bf16 %v456
    %v1073 = vunpack.c.h.bf16 %v455
    %v1074 = vunpack.c.h.bf16 %v456
    %v1075 = vunpack.c.l.bf16 %v457
    %v1076 = vunpack.c.l.bf16 %v458
    %v1077 = vunpack.c.h.bf16 %v457
    %v1078 = vunpack.c.h.bf16 %v458
    %v1079 = vunpack.c.l.bf16 %v459
    %v1080 = vunpack.c.l.bf16 %v460
    %v1081 = vunpack.c.h.bf16 %v459
    %v1082 = vunpack.c.h.bf16 %v460
    %v1083 = vadd.f32 %v1029, %v1067
    %v1084 = vadd.f32 %v1031, %v1068
    %v1085 = vadd.f32 %v1033, %v1069
    %v1086 = vadd.f32 %v1035, %v1070
    %v1087 = vadd.f32 %v1039, %v1071
    %v1088 = vadd.f32 %v1041, %v1072
    %v1089 = vadd.f32 %v1043, %v1073
    %v1090 = vadd.f32 %v1045, %v1074
    %v1091 = vadd.f32 %v1049, %v1075
    %v1092 = vadd.f32 %v1051, %v1076
    %v1093 = vadd.f32 %v1053, %v1077
    %v1094 = vadd.f32 %v1055, %v1078
    %v1095 = vadd.f32 %v1059, %v1079
    %v1096 = vadd.f32 %v1061, %v1080
    %v1097 = vadd.f32 %v1063, %v1081
    %v1098 = vadd.f32 %v1065, %v1082
    %v1099 = vpack.c.bf16 %v1085, %v1083
    %v1100 = vpack.c.bf16 %v1086, %v1084
    %v1101 = vpack.c.bf16 %v1089, %v1087
    %v1102 = vpack.c.bf16 %v1090, %v1088
    %v1103 = vpack.c.bf16 %v1093, %v1091
    %v1104 = vpack.c.bf16 %v1094, %v1092
    %v1105 = vpack.c.bf16 %v1097, %v1095
    %v1106 = vpack.c.bf16 %v1098, %v1096
    %v1107 = vld [vmem:[#allocation10] sm:$0xf]
    %v1108 = vld [vmem:[#allocation10 + $0x4] sm:$0xf]
    %v1109 = vld [vmem:[#allocation10 + $0x8] sm:$0xf]
    %v1110 = vld [vmem:[#allocation10 + $0xc] sm:$0xf]
    %v1111 = vld [vmem:[#allocation10 + $0x10] sm:$0xf]
    %v1112 = vld [vmem:[#allocation10 + $0x14] sm:$0xf]
    %v1113 = vld [vmem:[#allocation10 + $0x18] sm:$0xf]
    %v1114 = vld [vmem:[#allocation10 + $0x1c] sm:$0xf]
    %v1115 = vld [vmem:[#allocation10 + $0x20] sm:$0xf]
    %v1116 = vld [vmem:[#allocation10 + $0x24] sm:$0xf]
    %v1117 = vld [vmem:[#allocation10 + $0x28] sm:$0xf]
    %v1118 = vld [vmem:[#allocation10 + $0x2c] sm:$0xf]
    %v1119 = vld [vmem:[#allocation10 + $0x30] sm:$0xf]
    %v1120 = vld [vmem:[#allocation10 + $0x34] sm:$0xf]
    %v1121 = vld [vmem:[#allocation10 + $0x38] sm:$0xf]
    %v1122 = vld [vmem:[#allocation10 + $0x3c] sm:$0xf]
    %v1123 = vld [vmem:[#allocation10 + $0x40] sm:$0xf]
    %v1124 = vld [vmem:[#allocation10 + $0x44] sm:$0xf]
    %v1125 = vld [vmem:[#allocation10 + $0x48] sm:$0xf]
    %v1126 = vld [vmem:[#allocation10 + $0x4c] sm:$0xf]
    %v1127 = vld [vmem:[#allocation10 + $0x50] sm:$0xf]
    %v1128 = vld [vmem:[#allocation10 + $0x54] sm:$0xf]
    %v1129 = vld [vmem:[#allocation10 + $0x58] sm:$0xf]
    %v1130 = vld [vmem:[#allocation10 + $0x5c] sm:$0xf]
    %v1131 = vld [vmem:[#allocation10 + $0x60] sm:$0xf]
    %v1132 = vld [vmem:[#allocation10 + $0x64] sm:$0xf]
    %v1133 = vld [vmem:[#allocation10 + $0x68] sm:$0xf]
    %v1134 = vld [vmem:[#allocation10 + $0x6c] sm:$0xf]
    %v1135 = vld [vmem:[#allocation10 + $0x70] sm:$0xf]
    %v1136 = vld [vmem:[#allocation10 + $0x74] sm:$0xf]
    %v1137 = vld [vmem:[#allocation10 + $0x78] sm:$0xf]
    %v1138 = vld [vmem:[#allocation10 + $0x7c] sm:$0xf]
    %v1139 = vld [vmem:[%s6] sm:$0x1]
    %v1141 = vlaneseq
    %v1142 = vshrl.u32 %v1141, 7
    %v1143 = vsub.s32 0, %v1142
    %v1144 = vrot.slane %v1139, %v1143
    %v1178 = vunpack.c.l.b16 %v1107
    %v1179 = vunpack.c.l.b16 %v1108
    %v1180 = vunpack.c.l.b16 %v1109
    %v1181 = vunpack.c.l.b16 %v1110
    %v1182 = vunpack.c.l.b16 %v1111
    %v1183 = vunpack.c.l.b16 %v1112
    %v1184 = vunpack.c.l.b16 %v1113
    %v1185 = vunpack.c.l.b16 %v1114
    %v1186 = vunpack.c.l.b16 %v1115
    %v1187 = vunpack.c.l.b16 %v1116
    %v1188 = vunpack.c.l.b16 %v1117
    %v1189 = vunpack.c.l.b16 %v1118
    %v1190 = vunpack.c.l.b16 %v1119
    %v1191 = vunpack.c.l.b16 %v1120
    %v1192 = vunpack.c.l.b16 %v1121
    %v1193 = vunpack.c.l.b16 %v1122
    %v1194 = vunpack.c.l.b16 %v1123
    %v1195 = vunpack.c.l.b16 %v1124
    %v1196 = vunpack.c.l.b16 %v1125
    %v1197 = vunpack.c.l.b16 %v1126
    %v1198 = vunpack.c.l.b16 %v1127
    %v1199 = vunpack.c.l.b16 %v1128
    %v1200 = vunpack.c.l.b16 %v1129
    %v1201 = vunpack.c.l.b16 %v1130
    %v1202 = vunpack.c.l.b16 %v1131
    %v1203 = vunpack.c.l.b16 %v1132
    %v1204 = vunpack.c.l.b16 %v1133
    %v1205 = vunpack.c.l.b16 %v1134
    %v1206 = vunpack.c.l.b16 %v1135
    %v1207 = vunpack.c.l.b16 %v1136
    %v1208 = vunpack.c.l.b16 %v1137
    %v1209 = vunpack.c.l.b16 %v1138
    %v1210 = vpack.c.b16 %v1179, %v1178
    %v1211 = vpack.c.b16 %v1181, %v1180
    %v1212 = vpack.c.b16 %v1183, %v1182
    %v1213 = vpack.c.b16 %v1185, %v1184
    %v1214 = vpack.c.b16 %v1187, %v1186
    %v1215 = vpack.c.b16 %v1189, %v1188
    %v1216 = vpack.c.b16 %v1191, %v1190
    %v1217 = vpack.c.b16 %v1193, %v1192
    %v1218 = vpack.c.b16 %v1195, %v1194
    %v1219 = vpack.c.b16 %v1197, %v1196
    %v1220 = vpack.c.b16 %v1199, %v1198
    %v1221 = vpack.c.b16 %v1201, %v1200
    %v1222 = vpack.c.b16 %v1203, %v1202
    %v1223 = vpack.c.b16 %v1205, %v1204
    %v1224 = vpack.c.b16 %v1207, %v1206
    %v1225 = vpack.c.b16 %v1209, %v1208
    %1242 = vmatprep.subr.bf16.mxu0 0
    %1243 = vmatpush1.bf16.msra.mxu0 %v1210
    %1244 = vmatprep.subr.bf16.mxu0 0
    %1245 = vmatpush1.bf16.msra.mxu0 %v1211
    %1246 = vmatprep.subr.bf16.mxu0 0
    %1247 = vmatpush1.bf16.msra.mxu0 %v1212
    %1248 = vmatprep.subr.bf16.mxu0 0
    %1249 = vmatpush1.bf16.msra.mxu0 %v1213
    %1250 = vmatprep.subr.bf16.mxu0 0
    %1251 = vmatpush1.bf16.msra.mxu0 %v1214
    %1252 = vmatprep.subr.bf16.mxu0 0
    %1253 = vmatpush1.bf16.msra.mxu0 %v1215
    %1254 = vmatprep.subr.bf16.mxu0 0
    %1255 = vmatpush1.bf16.msra.mxu0 %v1216
    %1256 = vmatprep.subr.bf16.mxu0 0
    %1257 = vmatpush1.bf16.msra.mxu0 %v1217
    %1258 = vmatprep.subr.bf16.mxu0 0
    %1259 = vmatpush1.bf16.msra.mxu0 %v1218
    %1260 = vmatprep.subr.bf16.mxu0 0
    %1261 = vmatpush1.bf16.msra.mxu0 %v1219
    %1262 = vmatprep.subr.bf16.mxu0 0
    %1263 = vmatpush1.bf16.msra.mxu0 %v1220
    %1264 = vmatprep.subr.bf16.mxu0 0
    %1265 = vmatpush1.bf16.msra.mxu0 %v1221
    %1266 = vmatprep.subr.bf16.mxu0 0
    %1267 = vmatpush1.bf16.msra.mxu0 %v1222
    %1268 = vmatprep.subr.bf16.mxu0 0
    %1269 = vmatpush1.bf16.msra.mxu0 %v1223
    %1270 = vmatprep.subr.bf16.mxu0 0
    %1271 = vmatpush1.bf16.msra.mxu0 %v1224
    %1272 = vmatprep.subr.bf16.mxu0 0
    %1273 = vmatpush1.bf16.msra.mxu0 %v1225
    %1274 = vmatprep.mubr.bf16.mxu0 %v1100
    %1275 = vmatmul.mubr.bf16.gmra.mrb[0].mxu0 %v1099
    %v1276 = vpop.f32.mrb[0].mxu0
    %v1277 = vadd.f32 %v1144, %v1276
    %v1278 = vpop.f32.mrb[0].mxu0
    %v1279 = vpop.f32.mrb[0].mxu0
    %v1280 = vadd.f32 %v1144, %v1279
    %v1281 = vpop.f32.mrb[0].mxu0
    %1282 = vmatprep.mubr.bf16.mxu0 %v1102
    %1283 = vmatmul.mubr.bf16.gmra.mrb[0].mxu0 %v1101
    %v1284 = vpop.f32.mrb[0].mxu0
    %v1285 = vadd.f32 %v1144, %v1284
    %v1286 = vpop.f32.mrb[0].mxu0
    %v1287 = vpop.f32.mrb[0].mxu0
    %v1288 = vadd.f32 %v1144, %v1287
    %v1289 = vpop.f32.mrb[0].mxu0
    %1290 = vmatprep.mubr.bf16.mxu0 %v1104
    %1291 = vmatmul.mubr.bf16.gmra.mrb[0].mxu0 %v1103
    %v1292 = vpop.f32.mrb[0].mxu0
    %v1293 = vadd.f32 %v1144, %v1292
    %v1294 = vpop.f32.mrb[0].mxu0
    %v1295 = vpop.f32.mrb[0].mxu0
    %v1296 = vadd.f32 %v1144, %v1295
    %v1297 = vpop.f32.mrb[0].mxu0
    %1298 = vmatprep.mubr.bf16.mxu0 %v1106
    %1299 = vmatmul.mubr.bf16.gmra.mrb[0].mxu0 %v1105
    %v1300 = vpop.f32.mrb[0].mxu0
    %v1301 = vadd.f32 %v1144, %v1300
    %v1302 = vpop.f32.mrb[0].mxu0
    %v1303 = vpop.f32.mrb[0].mxu0
    %v1304 = vadd.f32 %v1144, %v1303
    %v1305 = vpop.f32.mrb[0].mxu0
    %1306 = vdwg.mxu0
    %v1307 = vmul.f32 %v1277, 0.01
    %v1308 = vmul.f32 %v1280, 0.01
    %v1309 = vmul.f32 %v1285, 0.01
    %v1310 = vmul.f32 %v1288, 0.01
    %v1311 = vmul.f32 %v1293, 0.01
    %v1312 = vmul.f32 %v1296, 0.01
    %v1313 = vmul.f32 %v1301, 0.01
    %v1314 = vmul.f32 %v1304, 0.01
    %v1315 = vmax.f32 %v1277, %v1307
    %v1316 = vmax.f32 %v1280, %v1308
    %v1317 = vmax.f32 %v1285, %v1309
    %v1318 = vmax.f32 %v1288, %v1310
    %v1319 = vmax.f32 %v1293, %v1311
    %v1320 = vmax.f32 %v1296, %v1312
    %v1321 = vmax.f32 %v1301, %v1313
    %v1322 = vmax.f32 %v1304, %v1314
    %1323 = vst [vmem:[#allocation13] sm:$0xff] %v1315
    %1324 = vst [vmem:[#allocation13 + $0x8] sm:$0xff] %v1316
    %1325 = vst [vmem:[#allocation13 + $0x10] sm:$0xff] %v1317
    %1326 = vst [vmem:[#allocation13 + $0x18] sm:$0xff] %v1318
    %1327 = vst [vmem:[#allocation13 + $0x20] sm:$0xff] %v1319
    %1328 = vst [vmem:[#allocation13 + $0x28] sm:$0xff] %v1320
    %1329 = vst [vmem:[#allocation13 + $0x30] sm:$0xff] %v1321
    %1330 = vst [vmem:[#allocation13 + $0x38] sm:$0xff] %v1322
    // Predicated region
    $region54: #{kcs_path2d_forward.1} parent=1 // pred_check
      _
    $region55: #{kcs_path2d_forward.1} parent=1 // pred_check_branch
      %1332 = sbr.rel (0) target = $region57
    $region56: #{kcs_path2d_forward.1} parent=1 // pred_region
      %s1334 = ssub.s32 1024, 1024
      %1335 = vsyncadd [#allocation4], %s1334
      %s1336 = sshll.u32 [#allocation13], 4
      %s1337 = int_to_ptr.vmem [resolvable:$true] %s1336
      %1342 = dma.vmem_to_hbm [thread:$0]  %s1337, 1024, %s7, [#allocation4], 128, 128, 8
    $region57: #{kcs_path2d_forward.1} parent=1 // pred_fallthru
      _
    // Predicated region
    $region58: #{kcs_path2d_forward.1} parent=1 // pred_check
      _
    $region59: #{kcs_path2d_forward.1} parent=1 // pred_check_branch
      %1344 = sbr.rel (0) target = $region61
    $region60: #{kcs_path2d_forward.1} parent=1 // pred_region
      %1345 = dma.done [#allocation4], 1024
    $region61: #{kcs_path2d_forward.1} parent=1 // pred_fallthru
      _
    %1346 = vsyncpa [#allocation3], 1
    %1347 = vsyncpa [#allocation6], 1
    %1348 = vsyncpa [#allocation9], 1
    %1349 = vsyncpa [#allocation12], 1
    %1350 = vsyncpa [#allocation4], 1

</llo_original>
